<compile_context>
chip_gen: v5e
topology: v5e:2x2
jax: 0.10.0
libtpu: 0.0.40
codegen_flags: <defaults>
</compile_context>

<pallas_src>
import jax
import jax.numpy as jnp
from jax.experimental import pallas as pl
from jax.experimental.pallas import tpu as pltpu


# ----------------------------------------------------------------------------
# Kernel
# ----------------------------------------------------------------------------
def classifier_kernel(x_ref, w1_ref, b1_ref, wa_ref, ba_ref, wb_ref, bb_ref,
                      out_ref):
    def lin(h, w_ref, b_ref):
        # y = h @ W + b ; bf16 MXU inputs, f32 accumulation, f32 bias add.
        return jnp.dot(h.astype(w_ref.dtype), w_ref[...],
                       preferred_element_type=jnp.float32) + b_ref[...]

    # In-kernel bf16 cast of the streamed f32 activations (no host cast pass).
    x = x_ref[...].astype(w1_ref.dtype)                   # (TB, 4) bf16

    h1 = jnp.maximum(lin(x, w1_ref, b1_ref), 0.0)         # (TB, 112) + shared ReLU
    h2 = jnp.maximum(lin(h1, wa_ref, ba_ref), 0.0)        # (TB, 32)  fused tail+fc0+ReLU
    logits = lin(h2, wb_ref, bb_ref)                      # (TB, 3)   fused fc1+out

    # Softmax over 3 classes via explicit lane slices (avoids generic cross-lane
    # reductions over a 128-lane-padded vreg; stays on VPU + EUP).
    l0 = logits[:, 0:1]
    l1 = logits[:, 1:2]
    l2 = logits[:, 2:3]
    m = jnp.maximum(jnp.maximum(l0, l1), l2)              # (TB, 1)
    e = jnp.exp(logits - m)                               # (TB, 3)
    s = e[:, 0:1] + e[:, 1:2] + e[:, 2:3]                 # (TB, 1)
    # Exact reciprocal: rows sum to 1 to f32 precision (approx=True would be
    # ~1e-3 off); still cheap and off the binding slot.
    out_ref[...] = (e * pl.reciprocal(s, approx=False)).astype(out_ref.dtype)


# ----------------------------------------------------------------------------
# Parameter construction (mimics PyTorch default Linear init) and host-side
# algebraic folding of the ReLU-free linear chains.
# ----------------------------------------------------------------------------
_LAYER_CONFIGS = [
    (4, 32), (32, 16),              # left
    (4, 64), (64, 32), (32, 16),    # middle
    (4, 16), (16, 32), (32, 16),    # right
    (48, 32), (32, 16), (16, 3),    # fc
]


def _init_linear(key, in_f, out_f):
    k = 1.0 / jnp.sqrt(jnp.float32(in_f))
    kw, kb = jax.random.split(key)
    # stored as (in, out) so forward computes x @ W
    w = jax.random.uniform(kw, (in_f, out_f), jnp.float32, minval=-k, maxval=k)
    b = jax.random.uniform(kb, (1, out_f), jnp.float32, minval=-k, maxval=k)
    return w, b


def make_raw_params(key):
    keys = jax.random.split(key, len(_LAYER_CONFIGS))
    return [_init_linear(k, i, o) for k, (i, o) in zip(keys, _LAYER_CONFIGS)]


def _block_diag(blocks):
    rows = sum(b.shape[0] for b in blocks)
    cols = sum(b.shape[1] for b in blocks)
    out = jnp.zeros((rows, cols), jnp.float32)
    r = c = 0
    for b in blocks:
        out = out.at[r:r + b.shape[0], c:c + b.shape[1]].set(b)
        r += b.shape[0]
        c += b.shape[1]
    return out


def _mm(a, b):
    # f32 host-side fold with highest precision (cast to bf16 exactly once).
    return jnp.dot(a, b, precision="highest")


def pack_params(raw, matmul_dtype=jnp.bfloat16):
    """Fold the whole network into three matmuls: W1/b1, WA/bA, WB/bB."""
    (lw1, lb1), (lw2, lb2) = raw[0], raw[1]
    (mw1, mb1), (mw2, mb2), (mw3, mb3) = raw[2], raw[3], raw[4]
    (rw1, rb1), (rw2, rb2), (rw3, rb3) = raw[5], raw[6], raw[7]
    (fw1, fb1), (fw2, fb2), (fw3, fb3) = raw[8], raw[9], raw[10]

    # Layer 1 (precedes the single per-pathway ReLU): concat along out-features.
    w1 = jnp.concatenate([lw1, mw1, rw1], axis=1)                   # (4, 112)
    b1 = jnp.concatenate([lb1, mb1, rb1], axis=1)                   # (1, 112)

    # Fold each pathway's ReLU-free tail to one affine map, block-diag them so
    # concat([left, middle, right]) == h1 @ WC + bC.
    lW, lB = lw2, lb2                                               # (32, 16)
    mW, mB = _mm(mw2, mw3), _mm(mb2, mw3) + mb3                     # (64, 16)
    rW, rB = _mm(rw2, rw3), _mm(rb2, rw3) + rb3                     # (16, 16)
    WC = _block_diag([lW, mW, rW])                                  # (112, 48)
    bC = jnp.concatenate([lB, mB, rB], axis=1)                      # (1, 48)

    # Fold fc-0 in (the fc ReLU comes AFTER fc-0).
    WA = _mm(WC, fw1)                                               # (112, 32)
    bA = _mm(bC, fw1) + fb1                                         # (1, 32)

    # fc-1 and 'out' have no ReLU between them (duplicate-key OrderedDict).
    WB = _mm(fw2, fw3)                                              # (32, 3)
    bB = _mm(fb2, fw3) + fb3                                        # (1, 3)

    return [w1.astype(matmul_dtype), b1.astype(jnp.float32),
            WA.astype(matmul_dtype), bA.astype(jnp.float32),
            WB.astype(matmul_dtype), bB.astype(jnp.float32)]


# ----------------------------------------------------------------------------
# Wrapper
# ----------------------------------------------------------------------------
def _round_up(n, m):
    return ((n + m - 1) // m) * m


def classifier_forward(x, packed_params, *, block_rows=4096,
                       out_dtype=jnp.float32):
    B, F = x.shape

    # Batch tile: multiple of 8 sublanes; capped so the grid has >= 2 steps
    # whenever possible (v7x megacore can shard the "parallel" axis across its
    # 2 TensorCores; the extra ~0.35us step is negligible on 1-TC chips).
    full = _round_up(max(B, 1), 8)
    half = _round_up(pl.cdiv(full, 2), 8)
    TB = max(8, min(block_rows, half))
    Bp = _round_up(B, TB)

    # x stays f32 in HBM; the bf16 cast happens in-kernel, so there is no
    # separate host-side cast pass.  Padding only materializes when needed.
    xp = x if Bp == B else jnp.pad(x, ((0, Bp - B), (0, 0)))

    in_specs = [pl.BlockSpec((TB, F), lambda i: (i, 0))]
    for p in packed_params:
        # weights/biases: full-array blocks, constant index_map -> VMEM-resident
        in_specs.append(pl.BlockSpec(tuple(p.shape), lambda i: (0, 0)))

    # Scoped-VMEM limit: double-buffered x/out blocks plus a handful of
    # lane-padded (TB,128) f32 intermediates; give headroom, but stay well
    # under v7x's 64 MiB physical VMEM (v5e/v6e have 128 MiB).
    est = TB * 128 * 40                      # ~40 B per (row, lane) resident
    vmem_limit = int(min(48 * 2**20, max(32 * 2**20, 2 * est)))

    out = pl.pallas_call(
        classifier_kernel,
        out_shape=jax.ShapeDtypeStruct((Bp, 3), out_dtype),
        grid=(Bp // TB,),
        in_specs=in_specs,
        out_specs=pl.BlockSpec((TB, 3), lambda i: (i, 0)),
        compiler_params=pltpu.CompilerParams(
            dimension_semantics=("parallel",),
            vmem_limit_bytes=vmem_limit),
    )(xp, *packed_params)
    return out[:B]


# ----------------------------------------------------------------------------
# Pure-JAX reference (un-merged, f32) for correctness checking.
# ----------------------------------------------------------------------------
def reference_forward(x, raw):
    (lw1, lb1), (lw2, lb2) = raw[0], raw[1]
    (mw1, mb1), (mw2, mb2), (mw3, mb3) = raw[2], raw[3], raw[4]
    (rw1, rb1), (rw2, rb2), (rw3, rb3) = raw[5], raw[6], raw[7]
    (fw1, fb1), (fw2, fb2), (fw3, fb3) = raw[8], raw[9], raw[10]

    lin = lambda h, w, b: h @ w + b
    relu = lambda h: jnp.maximum(h, 0.0)

    left = lin(relu(lin(x, lw1, lb1)), lw2, lb2)
    middle = lin(lin(relu(lin(x, mw1, mb1)), mw2, mb2), mw3, mb3)
    right = lin(lin(relu(lin(x, rw1, rb1)), rw2, rb2), rw3, rb3)
    concat = jnp.concatenate([left, middle, right], axis=1)

    h = relu(lin(concat, fw1, fb1))
    h = lin(h, fw2, fb2)                  # no ReLU (duplicate-key behavior)
    logits = lin(h, fw3, fb3)
    return jax.nn.softmax(logits, axis=1)


# ----------------------------------------------------------------------------
if __name__ == "__main__":
    key = jax.random.PRNGKey(0)
    kx, kp = jax.random.split(key)

    raw_params = make_raw_params(kp)
    packed = pack_params(raw_params)

    # Small example consistent with the module: iris-style 4 input features.
    batch = 8
    x = jax.random.normal(kx, (batch, 4), jnp.float32)

    y = jax.block_until_ready(classifier_forward(x, packed))
    assert y.shape == (batch, 3)
    assert jnp.allclose(jnp.sum(y, axis=1), 1.0, atol=1e-3)
    y_ref = reference_forward(x, raw_params)
    assert float(jnp.max(jnp.abs(y - y_ref))) < 3e-2, "mismatch vs f32 reference"

    # Exercise a multi-step grid with batch padding (300 rows, TB=128 -> grid=3).
    x2 = jax.random.normal(kx, (300, 4), jnp.float32)
    y2 = jax.block_until_ready(classifier_forward(x2, packed, block_rows=128))
    assert y2.shape == (300, 3)
    assert jnp.allclose(jnp.sum(y2, axis=1), 1.0, atol=1e-3)
    y2_ref = reference_forward(x2, raw_params)
    assert float(jnp.max(jnp.abs(y2 - y2_ref))) < 3e-2, "mismatch vs f32 reference"

    # Default tile sizing path (grid >= 2 for v7x megacore).
    y3 = jax.block_until_ready(classifier_forward(x2, packed))
    assert y3.shape == (300, 3)
    assert float(jnp.max(jnp.abs(y3 - y2_ref))) < 3e-2, "mismatch vs f32 reference"

    print("KERNEL_OK")
</pallas_src>

<mosaic_0001>
module attributes {stable_mosaic.version = 11 : i64} {
  func.func @classifier_kernel(%arg0: i32, %arg1: memref<8x4xf32, #tpu.memory_space<vmem>>, %arg2: memref<4x112xbf16, #tpu.memory_space<vmem>>, %arg3: memref<1x112xf32, #tpu.memory_space<vmem>>, %arg4: memref<112x32xbf16, #tpu.memory_space<vmem>>, %arg5: memref<1x32xf32, #tpu.memory_space<vmem>>, %arg6: memref<32x3xbf16, #tpu.memory_space<vmem>>, %arg7: memref<1x3xf32, #tpu.memory_space<vmem>>, %arg8: memref<8x3xf32, #tpu.memory_space<vmem>>) attributes {dimension_semantics = [#tpu.dimension_semantics<parallel>], iteration_bounds = array<i64: 1>, scalar_prefetch = 0 : i64, scratch_operands = 0 : i64, tpu.core_type = #tpu.core_type<tc>, window_params = [{transform_indices = @transform_0, window_bounds = array<i64: 8, 4>}, {pipeline_mode = #tpu.pipeline_mode<synchronous>, transform_indices = @transform_1, window_bounds = array<i64: 4, 112>}, {pipeline_mode = #tpu.pipeline_mode<synchronous>, transform_indices = @transform_2, window_bounds = array<i64: 1, 112>}, {pipeline_mode = #tpu.pipeline_mode<synchronous>, transform_indices = @transform_3, window_bounds = array<i64: 112, 32>}, {pipeline_mode = #tpu.pipeline_mode<synchronous>, transform_indices = @transform_4, window_bounds = array<i64: 1, 32>}, {pipeline_mode = #tpu.pipeline_mode<synchronous>, transform_indices = @transform_5, window_bounds = array<i64: 32, 3>}, {pipeline_mode = #tpu.pipeline_mode<synchronous>, transform_indices = @transform_6, window_bounds = array<i64: 1, 3>}, {transform_indices = @transform_7, window_bounds = array<i64: 8, 3>}]} {
    %c0 = arith.constant 0 : index
    %c0_0 = arith.constant 0 : index
    %0 = vector.load %arg1[%c0, %c0_0] : memref<8x4xf32, #tpu.memory_space<vmem>>, vector<8x4xf32>
    %1 = arith.truncf %0 : vector<8x4xf32> to vector<8x4xbf16>
    %c0_1 = arith.constant 0 : index
    %c0_2 = arith.constant 0 : index
    %2 = vector.load %arg2[%c0_1, %c0_2] : memref<4x112xbf16, #tpu.memory_space<vmem>>, vector<4x112xbf16>
    %cst = arith.constant dense<0.000000e+00> : vector<8x112xf32>
    %3 = tpu.matmul %1, %2, %cst {dimension_numbers = #tpu.dot_dimension_numbers<[1], [0], [0], [1], [0, 0, 1, 1], [], []>} : vector<8x4xbf16>, vector<4x112xbf16>, vector<8x112xf32> -> vector<8x112xf32>
    %c0_3 = arith.constant 0 : index
    %c0_4 = arith.constant 0 : index
    %4 = vector.load %arg3[%c0_3, %c0_4] : memref<1x112xf32, #tpu.memory_space<vmem>>, vector<1x112xf32>
    %5 = vector.broadcast %4 : vector<1x112xf32> to vector<8x112xf32>
    %6 = arith.addf %3, %5 : vector<8x112xf32>
    %cst_5 = arith.constant 0.000000e+00 : f32
    %7 = vector.broadcast %cst_5 : f32 to vector<8x112xf32>
    %8 = arith.maximumf %6, %7 : vector<8x112xf32>
    %9 = arith.truncf %8 : vector<8x112xf32> to vector<8x112xbf16>
    %c0_6 = arith.constant 0 : index
    %c0_7 = arith.constant 0 : index
    %10 = vector.load %arg4[%c0_6, %c0_7] : memref<112x32xbf16, #tpu.memory_space<vmem>>, vector<112x32xbf16>
    %cst_8 = arith.constant dense<0.000000e+00> : vector<8x32xf32>
    %11 = tpu.matmul %9, %10, %cst_8 {dimension_numbers = #tpu.dot_dimension_numbers<[1], [0], [0], [1], [0, 0, 1, 1], [], []>} : vector<8x112xbf16>, vector<112x32xbf16>, vector<8x32xf32> -> vector<8x32xf32>
    %c0_9 = arith.constant 0 : index
    %c0_10 = arith.constant 0 : index
    %12 = vector.load %arg5[%c0_9, %c0_10] : memref<1x32xf32, #tpu.memory_space<vmem>>, vector<1x32xf32>
    %13 = vector.broadcast %12 : vector<1x32xf32> to vector<8x32xf32>
    %14 = arith.addf %11, %13 : vector<8x32xf32>
    %cst_11 = arith.constant 0.000000e+00 : f32
    %15 = vector.broadcast %cst_11 : f32 to vector<8x32xf32>
    %16 = arith.maximumf %14, %15 : vector<8x32xf32>
    %17 = arith.truncf %16 : vector<8x32xf32> to vector<8x32xbf16>
    %c0_12 = arith.constant 0 : index
    %c0_13 = arith.constant 0 : index
    %18 = vector.load %arg6[%c0_12, %c0_13] : memref<32x3xbf16, #tpu.memory_space<vmem>>, vector<32x3xbf16>
    %cst_14 = arith.constant dense<0.000000e+00> : vector<8x3xf32>
    %19 = tpu.matmul %17, %18, %cst_14 {dimension_numbers = #tpu.dot_dimension_numbers<[1], [0], [0], [1], [0, 0, 1, 1], [], []>} : vector<8x32xbf16>, vector<32x3xbf16>, vector<8x3xf32> -> vector<8x3xf32>
    %c0_15 = arith.constant 0 : index
    %c0_16 = arith.constant 0 : index
    %20 = vector.load %arg7[%c0_15, %c0_16] : memref<1x3xf32, #tpu.memory_space<vmem>>, vector<1x3xf32>
    %21 = vector.broadcast %20 : vector<1x3xf32> to vector<8x3xf32>
    %22 = arith.addf %19, %21 : vector<8x3xf32>
    %23 = vector.extract_strided_slice %22 {offsets = [0, 0], sizes = [8, 1], strides = [1, 1]} : vector<8x3xf32> to vector<8x1xf32>
    %24 = vector.extract_strided_slice %22 {offsets = [0, 1], sizes = [8, 1], strides = [1, 1]} : vector<8x3xf32> to vector<8x1xf32>
    %25 = vector.extract_strided_slice %22 {offsets = [0, 2], sizes = [8, 1], strides = [1, 1]} : vector<8x3xf32> to vector<8x1xf32>
    %26 = arith.maximumf %23, %24 : vector<8x1xf32>
    %27 = arith.maximumf %26, %25 : vector<8x1xf32>
    %28 = vector.broadcast %27 : vector<8x1xf32> to vector<8x3xf32>
    %29 = arith.subf %22, %28 : vector<8x3xf32>
    %30 = math.exp %29 : vector<8x3xf32>
    %31 = vector.extract_strided_slice %30 {offsets = [0, 0], sizes = [8, 1], strides = [1, 1]} : vector<8x3xf32> to vector<8x1xf32>
    %32 = vector.extract_strided_slice %30 {offsets = [0, 1], sizes = [8, 1], strides = [1, 1]} : vector<8x3xf32> to vector<8x1xf32>
    %33 = arith.addf %31, %32 : vector<8x1xf32>
    %34 = vector.extract_strided_slice %30 {offsets = [0, 2], sizes = [8, 1], strides = [1, 1]} : vector<8x3xf32> to vector<8x1xf32>
    %35 = arith.addf %33, %34 : vector<8x1xf32>
    %36 = tpu.reciprocal %35 : vector<8x1xf32> -> vector<8x1xf32>
    %37 = vector.broadcast %36 : vector<8x1xf32> to vector<8x3xf32>
    %38 = arith.mulf %30, %37 : vector<8x3xf32>
    %c0_17 = arith.constant 0 : index
    %c0_18 = arith.constant 0 : index
    %39 = vector.load %arg8[%c0_17, %c0_18] : memref<8x3xf32, #tpu.memory_space<vmem>>, vector<8x3xf32>
    tpu.vector_store %arg8[%c0_17, %c0_18], %38 {strides = array<i32>} : memref<8x3xf32, #tpu.memory_space<vmem>>, vector<8x3xf32>,
    return
  }
  func.func @transform_0(%arg0: i32) -> (i32, i32) {
    %c0_i32 = arith.constant 0 : i32
    %c0_i32_0 = arith.constant 0 : i32
    return %arg0, %c0_i32 : i32, i32
  }
  func.func @transform_1(%arg0: i32) -> (i32, i32) {
    %c0_i32 = arith.constant 0 : i32
    %c0_i32_0 = arith.constant 0 : i32
    %c0_i32_1 = arith.constant 0 : i32
    return %c0_i32, %c0_i32_0 : i32, i32
  }
  func.func @transform_2(%arg0: i32) -> (i32, i32) {
    %c0_i32 = arith.constant 0 : i32
    %c0_i32_0 = arith.constant 0 : i32
    %c0_i32_1 = arith.constant 0 : i32
    return %c0_i32, %c0_i32_0 : i32, i32
  }
  func.func @transform_3(%arg0: i32) -> (i32, i32) {
    %c0_i32 = arith.constant 0 : i32
    %c0_i32_0 = arith.constant 0 : i32
    %c0_i32_1 = arith.constant 0 : i32
    return %c0_i32, %c0_i32_0 : i32, i32
  }
  func.func @transform_4(%arg0: i32) -> (i32, i32) {
    %c0_i32 = arith.constant 0 : i32
    %c0_i32_0 = arith.constant 0 : i32
    %c0_i32_1 = arith.constant 0 : i32
    return %c0_i32, %c0_i32_0 : i32, i32
  }
  func.func @transform_5(%arg0: i32) -> (i32, i32) {
    %c0_i32 = arith.constant 0 : i32
    %c0_i32_0 = arith.constant 0 : i32
    %c0_i32_1 = arith.constant 0 : i32
    return %c0_i32, %c0_i32_0 : i32, i32
  }
  func.func @transform_6(%arg0: i32) -> (i32, i32) {
    %c0_i32 = arith.constant 0 : i32
    %c0_i32_0 = arith.constant 0 : i32
    %c0_i32_1 = arith.constant 0 : i32
    return %c0_i32, %c0_i32_0 : i32, i32
  }
  func.func @transform_7(%arg0: i32) -> (i32, i32) {
    %c0_i32 = arith.constant 0 : i32
    %c0_i32_0 = arith.constant 0 : i32
    return %arg0, %c0_i32 : i32, i32
  }
}

</mosaic_0001>

<llo_original>
// kernel: tpu_custom_call.1
$region0: #{tpu_custom_call.1}
  #allocation0 [shape = 'u32[]', space=smem, size = 0x4, offset = 0x4, fixed_abs, tag = 'smem constant byte address 0x4 - core index']
  #allocation1 [shape = 'u32[72,128]{1,0:T(1,128)}', space=vmem, size = 0x9000, scoped, tag = 'internal scratch']
  %s0 = inlined_call_operand.vmem [shape: f32[8,4], index: 0, kind: input, shape index: {}]
  %s1 = inlined_call_operand.vmem [shape: bf16[4,112], index: 1, kind: input, shape index: {}]
  %s2 = inlined_call_operand.vmem [shape: f32[1,112], index: 2, kind: input, shape index: {}]
  %s3 = inlined_call_operand.vmem [shape: bf16[112,32], index: 3, kind: input, shape index: {}]
  %s4 = inlined_call_operand.vmem [shape: f32[1,32], index: 4, kind: input, shape index: {}]
  %s5 = inlined_call_operand.vmem [shape: bf16[32,3], index: 5, kind: input, shape index: {}]
  %s6 = inlined_call_operand.vmem [shape: f32[1,3], index: 6, kind: input, shape index: {}]
  %s7 = inlined_call_operand.vmem [shape: f32[8,3], index: 7, kind: output, shape index: {}]
  %s8 = sld [smem:[#allocation0]]
  $region38: #{tpu_custom_call.1} parent=0
    _
  %s10 = ssub.s32 1, %s8
  %s11 = scalar_select 0, %s10, %s8
  // Predicated region
  $region2: #{tpu_custom_call.1} parent=0 // pred_check
    _
  $region3: #{tpu_custom_call.1} parent=0 // pred_check_branch
    %13 = sbr.rel (0) target = $region5
  $region4: #{tpu_custom_call.1} parent=0 // pred_region
    _
  $region5: #{tpu_custom_call.1} parent=0 // pred_fallthru
    _
  // Predicated region
  $region6: #{tpu_custom_call.1} parent=0 // pred_check
    _
  $region7: #{tpu_custom_call.1} parent=0 // pred_check_branch
    %15 = sbr.rel (0) target = $region9
  $region8: #{tpu_custom_call.1} parent=0 // pred_region
    _
  $region9: #{tpu_custom_call.1} parent=0 // pred_fallthru
    _
  // Predicated region
  $region10: #{tpu_custom_call.1} parent=0 // pred_check
    _
  $region11: #{tpu_custom_call.1} parent=0 // pred_check_branch
    %17 = sbr.rel (0) target = $region13
  $region12: #{tpu_custom_call.1} parent=0 // pred_region
    _
  $region13: #{tpu_custom_call.1} parent=0 // pred_fallthru
    _
  // Predicated region
  $region14: #{tpu_custom_call.1} parent=0 // pred_check
    _
  $region15: #{tpu_custom_call.1} parent=0 // pred_check_branch
    %19 = sbr.rel (0) target = $region17
  $region16: #{tpu_custom_call.1} parent=0 // pred_region
    _
  $region17: #{tpu_custom_call.1} parent=0 // pred_fallthru
    _
  // Predicated region
  $region18: #{tpu_custom_call.1} parent=0 // pred_check
    _
  $region19: #{tpu_custom_call.1} parent=0 // pred_check_branch
    %21 = sbr.rel (0) target = $region21
  $region20: #{tpu_custom_call.1} parent=0 // pred_region
    _
  $region21: #{tpu_custom_call.1} parent=0 // pred_fallthru
    _
  // Predicated region
  $region22: #{tpu_custom_call.1} parent=0 // pred_check
    _
  $region23: #{tpu_custom_call.1} parent=0 // pred_check_branch
    %23 = sbr.rel (0) target = $region25
  $region24: #{tpu_custom_call.1} parent=0 // pred_region
    _
  $region25: #{tpu_custom_call.1} parent=0 // pred_fallthru
    _
  // Predicated region
  $region26: #{tpu_custom_call.1} parent=0 // pred_check
    _
  $region27: #{tpu_custom_call.1} parent=0 // pred_check_branch
    %25 = sbr.rel (0) target = $region29
  $region28: #{tpu_custom_call.1} parent=0 // pred_region
    _
  $region29: #{tpu_custom_call.1} parent=0 // pred_fallthru
    _
  %v27 = vld [vmem:[%s0] sm:$0xff]
  %v28 = vpack.c.bf16 %v27, %v27
  %v29 = vld [vmem:[%s1] sm:$0x3]
  %v30 = vld [vmem:[%s2] sm:$0x1]
  %v32 = vperm.slane %v30, 0
  %vm34 = vcmask 31744
  %v36 = vsel %vm34, %v28, 0
  %vm38 = vcmask 1041408
  %v40 = vsel %vm38, %v29, 0
  %42 = vmatpush.bf16.msra.mxu0 0
  %43 = vmatpush.bf16.msra.mxu0 0
  %44 = vmatpush.bf16.msra.mxu0 0
  %45 = vmatpush.bf16.msra.mxu0 0
  %46 = vmatpush.bf16.msra.mxu0 0
  %47 = vmatpush.bf16.msra.mxu0 0
  %48 = vmatpush.bf16.msra.mxu0 0
  %49 = vmatpush.bf16.msra.mxu0 %v40
  %50 = vmatmul.bf16.gmra.mxu0 %v36
  %v51 = vpop.f32.mrf.mxu0
  %v52 = vadd.f32 %v32, %v51
  %v53 = vpop.f32.mrf.mxu0
  %54 = vdwg.mxu0
  %v55 = vmax.f32 %v52, 0.0
  %v56 = vpack.c.bf16 %v55, %v55
  %v57 = vld [vmem:[%s3] sm:$0xf]
  %v58 = vld [vmem:[%s3 + $0x4] sm:$0xf]
  %v59 = vld [vmem:[%s3 + $0x8] sm:$0xf]
  %v60 = vld [vmem:[%s3 + $0xc] sm:$0xf]
  %v61 = vld [vmem:[%s3 + $0x10] sm:$0xf]
  %v62 = vld [vmem:[%s3 + $0x14] sm:$0xf]
  %v63 = vld [vmem:[%s3 + $0x18] sm:$0xf]
  %v64 = vld [vmem:[%s3 + $0x1c] sm:$0xf]
  %v65 = vld [vmem:[%s3 + $0x20] sm:$0xf]
  %v66 = vld [vmem:[%s3 + $0x24] sm:$0xf]
  %v67 = vld [vmem:[%s3 + $0x28] sm:$0xf]
  %v68 = vld [vmem:[%s3 + $0x2c] sm:$0xf]
  %v69 = vld [vmem:[%s3 + $0x30] sm:$0xf]
  %v70 = vld [vmem:[%s3 + $0x34] sm:$0xf]
  %v71 = vld [vmem:[%s4] sm:$0x1]
  %v73 = vperm.slane %v71, 0
  %v89 = vunpack.c.l.b16 %v57
  %v90 = vunpack.c.l.b16 %v58
  %v91 = vunpack.c.l.b16 %v59
  %v92 = vunpack.c.l.b16 %v60
  %v93 = vunpack.c.l.b16 %v61
  %v94 = vunpack.c.l.b16 %v62
  %v95 = vunpack.c.l.b16 %v63
  %v96 = vunpack.c.l.b16 %v64
  %v97 = vunpack.c.l.b16 %v65
  %v98 = vunpack.c.l.b16 %v66
  %v99 = vunpack.c.l.b16 %v67
  %v100 = vunpack.c.l.b16 %v68
  %v101 = vunpack.c.l.b16 %v69
  %v102 = vunpack.c.l.b16 %v70
  %v103 = vpack.c.b16 %v90, %v89
  %v104 = vpack.c.b16 %v92, %v91
  %v105 = vpack.c.b16 %v94, %v93
  %v106 = vpack.c.b16 %v96, %v95
  %v107 = vpack.c.b16 %v98, %v97
  %v108 = vpack.c.b16 %v100, %v99
  %v109 = vpack.c.b16 %v102, %v101
  %vm117 = vcmask 916480
  %v119 = vsel %vm117, %v56, 0
  %121 = vmatpush.bf16.msra.mxu0 0
  %122 = vmatpush.bf16.msra.mxu0 %v109
  %123 = vmatpush.bf16.msra.mxu0 %v108
  %124 = vmatpush.bf16.msra.mxu0 %v107
  %125 = vmatpush.bf16.msra.mxu0 %v106
  %126 = vmatpush.bf16.msra.mxu0 %v105
  %127 = vmatpush.bf16.msra.mxu0 %v104
  %128 = vmatpush.bf16.msra.mxu0 %v103
  %129 = vmatmul.bf16.gmra.mxu0 %v119
  %v130 = vpop.f32.mrf.mxu0
  %v131 = vadd.f32 %v73, %v130
  %v132 = vpop.f32.mrf.mxu0
  %133 = vdwg.mxu0
  %v134 = vmax.f32 %v131, 0.0
  %v135 = vpack.c.bf16 %v134, %v134
  %v136 = vld [vmem:[%s5] sm:$0xf]
  %v137 = vld [vmem:[%s5 + $0x4] sm:$0xf]
  %v138 = vld [vmem:[%s5 + $0x8] sm:$0xf]
  %v139 = vld [vmem:[%s5 + $0xc] sm:$0xf]
  %v140 = vld [vmem:[%s6] sm:$0x1]
  %v142 = vperm.slane %v140, 0
  %v148 = vunpack.c.l.b16 %v136
  %v149 = vunpack.c.l.b16 %v137
  %v150 = vunpack.c.l.b16 %v138
  %v151 = vunpack.c.l.b16 %v139
  %v152 = vpack.c.b16 %v149, %v148
  %v153 = vpack.c.b16 %v151, %v150
  %vm156 = vcmask 261120
  %v158 = vsel %vm156, %v135, 0
  %160 = vmatpush.bf16.msra.mxu0 0
  %161 = vmatpush.bf16.msra.mxu0 0
  %162 = vmatpush.bf16.msra.mxu0 0
  %163 = vmatpush.bf16.msra.mxu0 0
  %164 = vmatpush.bf16.msra.mxu0 0
  %165 = vmatpush.bf16.msra.mxu0 0
  %166 = vmatpush.bf16.msra.mxu0 %v153
  %167 = vmatpush.bf16.msra.mxu0 %v152
  %168 = vmatmul.bf16.gmra.mxu0 %v158
  %v169 = vpop.f32.mrf.mxu0
  %v170 = vadd.f32 %v142, %v169
  %v171 = vpop.f32.mrf.mxu0
  %172 = vdwg.mxu0
  %174 = vrot.lane.b32.xlu0 %v170, 127
  %v175 = vpop.permute.xlu0 %174
  %v177 = vmax.f32 %v170, %v175
  %178 = vrot.lane.b32.xlu0 %v170, 126
  %v179 = vpop.permute.xlu0 %178
  %v181 = vmax.f32 %v177, %v179
  %183 = vset.pattern.permute.xlu0 0
  %184 = vperm.xlu0 %183, %v181
  %v185 = vpop.permute.xlu0 %184
  %v187 = vsub.f32 %v170, %v185
  %v188 = vmul.f32 %v187, 1.442695
  %v189 = vpow.pop %v188
  %191 = vrot.lane.b32.xlu0 %v189, 127
  %v192 = vpop.permute.xlu0 %191
  %v194 = vadd.f32 %v189, %v192
  %195 = vrot.lane.b32.xlu0 %v189, 126
  %v196 = vpop.permute.xlu0 %195
  %v198 = vadd.f32 %v194, %v196
  %v199 = vrcp.pop %v198
  %v200 = vmul.f32 %v198, %v199
  %v201 = vsub.f32 1.0, %v200
  %v202 = vmul.f32 %v199, %v201
  %v203 = vadd.f32 %v199, %v202
  %vm204 = vweird.f32 %v198
  %vm205 = vweird.f32 %v199
  %vm206 = vmor %vm204, %vm205
  %v207 = vsel %vm206, %v199, %v203
  %v208 = vand.u32 2147483647, %v198
  %vm209 = vcmp.eq.f32.partialorder %v208, 8.507059e+37
  %v210 = vand.u32 %v198, 2147483648
  %v211 = vor.u32 1.1754944e-38, %v210
  %v212 = vsel %vm209, %v211, %v207
  %214 = vset.pattern.permute.xlu0 0
  %215 = vperm.xlu0 %214, %v212
  %v216 = vpop.permute.xlu0 %215
  %v218 = vmul.f32 %v189, %v216
  %vm219 = vcmask 23552
  %220 = vst.msk [vmem:[%s7] sm:$0xff] %vm219, %v218
  // Predicated region
  $region30: #{tpu_custom_call.1} parent=0 // pred_check
    _
  $region31: #{tpu_custom_call.1} parent=0 // pred_check_branch
    %222 = sbr.rel (0) target = $region33
  $region32: #{tpu_custom_call.1} parent=0 // pred_region
    _
  $region33: #{tpu_custom_call.1} parent=0 // pred_fallthru
    _
  // Predicated region
  $region34: #{tpu_custom_call.1} parent=0 // pred_check
    _
  $region35: #{tpu_custom_call.1} parent=0 // pred_check_branch
    %224 = sbr.rel (0) target = $region37
  $region36: #{tpu_custom_call.1} parent=0 // pred_region
    _
  $region37: #{tpu_custom_call.1} parent=0 // pred_fallthru
    _

</llo_original>
